<compile_context>
chip_gen: v7x
topology: tpu7x:2x2x1
jax: 0.10.0
libtpu: 0.0.40
codegen_flags: <defaults>
</compile_context>

<pallas_src>
import jax
import jax.numpy as jnp
from jax.experimental import pallas as pl
from jax.experimental.pallas import tpu as pltpu

INPUT_DIM = 6     # (x, y, t, u, u_type, ...)
HIDDEN = 32
LATENT = 32       # embed_dim, num_heads = 1
X_PAD = 8         # input feature dim zero-padded to a sublane-friendly width
SLAB = 256        # lane width of the packed weight / bias slabs (2 x 128)
OUT_PAD = 128     # lane-dense output row width


def encoder_kernel(x_ref, w1_ref, ws_ref, bs_ref, out_ref):
    """One grid step == one sample: x (1, N, 8) -> z_global row (1, 1, 128)."""
    x = x_ref[0]                       # (N, X_PAD); lanes >= INPUT_DIM are zero
    w1 = w1_ref[...]                   # (X_PAD, HIDDEN); rows >= INPUT_DIM are zero
    ws = ws_ref[...]                   # (HIDDEN, SLAB) packed weights
    bs = bs_ref[...]                   # (1, SLAB)      packed biases

    w2 = ws[:, 0:LATENT]                                 # (32, 32)
    w_score = ws[:, 2 * LATENT:2 * LATENT + 1]           # (32, 1)  = wk @ (scale*q_proj)^T
    wvo = ws[:, 128:128 + OUT_PAD]                       # (32, 128): wv@wo in lanes [0,32)
    b1 = bs[:, 0:HIDDEN]                                 # (1, 32)
    b2 = bs[:, HIDDEN:HIDDEN + LATENT]                   # (1, 32)
    b_out = bs[:, 128:128 + OUT_PAD]                     # (1, 128): bv@wo + bo in lanes [0,32)

    # --- point-wise MLP encoder: Linear -> ReLU -> Linear -> Tanh ---
    h = jnp.maximum(jnp.dot(x, w1, preferred_element_type=jnp.float32) + b1, 0.0)
    z = jnp.tanh(jnp.dot(h, w2, preferred_element_type=jnp.float32) + b2)      # (N, 32)

    # --- single-query attention (query folded into the score weights) ---
    # scores[n] = <scale*q_proj, z[n]@wk + bk> = z[n] @ w_score + const
    # (the constant <scale*q_proj, bk> is the same for every key -> cancels in softmax)
    s = jnp.dot(z, w_score, preferred_element_type=jnp.float32)                # (N, 1)
    s = s - jnp.max(s, axis=0, keepdims=True)
    e = jnp.exp(s)                                                             # (N, 1)
    # weighted sum over the raw latents; V- and out-projections are folded offline
    ctx = jnp.sum(e * z, axis=0, keepdims=True)                                # (1, 32)
    inv = pl.reciprocal(jnp.sum(e, axis=0, keepdims=True), approx=True)        # EUP slot
    ctx = ctx * inv

    # lane-dense final row: lanes [0,32) hold the result, the rest are exact zeros
    out_ref[0] = jnp.dot(ctx, wvo, preferred_element_type=jnp.float32) + b_out  # (1, 128)


def pack_params(p):
    """Offline algebraic folds + packing into 3 VMEM-friendly slabs."""
    scale = 1.0 / jnp.sqrt(jnp.float32(LATENT))
    q_proj = (p["query"] @ p["wq"] + p["bq"]) * scale          # (1, 32)
    w_score = p["wk"] @ q_proj.T                               # (32, 1)
    wvo = p["wv"] @ p["wo"]                                    # (32, 32)
    b_out = p["bv"] @ p["wo"] + p["bo"]                        # (1, 32)

    w1p = jnp.zeros((X_PAD, HIDDEN), jnp.float32).at[:INPUT_DIM, :].set(p["w1"])

    wslab = jnp.zeros((HIDDEN, SLAB), jnp.float32)
    wslab = wslab.at[:, 0:LATENT].set(p["w2"])
    wslab = wslab.at[:, 2 * LATENT:2 * LATENT + 1].set(w_score)
    wslab = wslab.at[:, 128:128 + LATENT].set(wvo)

    bslab = jnp.zeros((1, SLAB), jnp.float32)
    bslab = bslab.at[:, 0:HIDDEN].set(p["b1"])
    bslab = bslab.at[:, HIDDEN:HIDDEN + LATENT].set(p["b2"])
    bslab = bslab.at[:, 128:128 + LATENT].set(b_out)

    return dict(w1p=w1p, wslab=wslab, bslab=bslab)


def encoder_forward(xytu_type, packed):
    """xytu_type: (N, 6) single sample or (B, N, 6) batch -> (B, 32) (B=1 for single)."""
    x = xytu_type[None] if xytu_type.ndim == 2 else xytu_type       # (B, N, 6)
    B, N, _ = x.shape
    x = jnp.pad(x, ((0, 0), (0, 0), (0, X_PAD - INPUT_DIM)))        # (B, N, 8)

    out = pl.pallas_call(
        encoder_kernel,
        out_shape=jax.ShapeDtypeStruct((B, 1, OUT_PAD), jnp.float32),
        grid=(B,),
        in_specs=[
            pl.BlockSpec((1, N, X_PAD), lambda b: (b, 0, 0)),       # per-sample points
            pl.BlockSpec((X_PAD, HIDDEN), lambda b: (0, 0)),        # w1 (resident)
            pl.BlockSpec((HIDDEN, SLAB), lambda b: (0, 0)),         # packed weights
            pl.BlockSpec((1, SLAB), lambda b: (0, 0)),              # packed biases
        ],
        out_specs=pl.BlockSpec((1, 1, OUT_PAD), lambda b: (b, 0, 0)),
        compiler_params=pltpu.CompilerParams(dimension_semantics=("parallel",)),
    )(x, packed["w1p"], packed["wslab"], packed["bslab"])

    return out[:, 0, :LATENT]                                       # (B, 32)


def init_params(key):
    """Deterministic synthetic parameters matching the PyTorch module's shapes."""
    ks = jax.random.split(key, 9)
    # nn.Linear stores (out, in); we keep the transposed (in, out) layout.
    w1 = 0.1 * jax.random.normal(ks[0], (INPUT_DIM, HIDDEN), jnp.float32)
    b1 = 0.1 * jax.random.normal(ks[1], (1, HIDDEN), jnp.float32)
    w2 = 0.1 * jax.random.normal(ks[2], (HIDDEN, LATENT), jnp.float32)
    b2 = 0.1 * jax.random.normal(ks[3], (1, LATENT), jnp.float32)
    # self.query = nn.Parameter(torch.randn(1, 1, latent_dim)) -> flattened to (1, E)
    query = jax.random.normal(ks[4], (1, LATENT), jnp.float32)
    # MultiheadAttention in_proj_weight (3E, E) / in_proj_bias (3E,)
    in_proj_w = 0.1 * jax.random.normal(ks[5], (3 * LATENT, LATENT), jnp.float32)
    in_proj_b = 0.1 * jax.random.normal(ks[6], (3 * LATENT,), jnp.float32)
    wq = in_proj_w[:LATENT].T
    wk = in_proj_w[LATENT:2 * LATENT].T
    wv = in_proj_w[2 * LATENT:].T
    bq = in_proj_b[:LATENT][None, :]
    bk = in_proj_b[LATENT:2 * LATENT][None, :]
    bv = in_proj_b[2 * LATENT:][None, :]
    # out_proj: Linear(E, E)
    wo = 0.1 * jax.random.normal(ks[7], (LATENT, LATENT), jnp.float32)
    bo = 0.1 * jax.random.normal(ks[8], (1, LATENT), jnp.float32)
    return dict(w1=w1, b1=b1, w2=w2, b2=b2, query=query,
                wq=wq, bq=bq, wk=wk, bk=bk, wv=wv, bv=bv, wo=wo, bo=bo)


def encoder_reference(x, p):
    """Pure-JAX reference mirroring the PyTorch forward exactly (single sample)."""
    h = jnp.maximum(x @ p["w1"] + p["b1"], 0.0)
    z = jnp.tanh(h @ p["w2"] + p["b2"])
    q = p["query"] @ p["wq"] + p["bq"]
    k = z @ p["wk"] + p["bk"]
    v = z @ p["wv"] + p["bv"]
    s = (q / jnp.sqrt(jnp.float32(LATENT))) @ k.T
    a = jax.nn.softmax(s, axis=-1)
    return a @ v @ p["wo"] + p["bo"]


if __name__ == "__main__":
    key = jax.random.PRNGKey(0)
    k_x, k_p = jax.random.split(key)

    B, N = 2, 8  # two physics samples, 8 (x, t, u, u_type) points each
    xytu_type = jax.random.normal(k_x, (B, N, INPUT_DIM), jnp.float32)
    params = init_params(k_p)
    packed = pack_params(params)

    z_global = encoder_forward(xytu_type, packed)
    z_global = jax.block_until_ready(z_global)

    ref = jnp.concatenate([encoder_reference(xytu_type[b], params) for b in range(B)], axis=0)
    assert z_global.shape == (B, LATENT)
    # Tolerance: the offline folds reassociate matmuls and the softmax uses the
    # EUP approximate reciprocal (~1e-4 relative), so compare at 1e-3.
    assert jnp.allclose(z_global, ref, atol=1e-3, rtol=1e-3), "batched mismatch vs reference"

    # Single-sample path: (N, 6) -> (1, 32), matching the PyTorch module's output shape.
    z1 = jax.block_until_ready(encoder_forward(xytu_type[0], packed))
    assert z1.shape == (1, LATENT)
    assert jnp.allclose(z1, ref[0:1], atol=1e-3, rtol=1e-3), "single-sample mismatch vs reference"

    print("KERNEL_OK")
</pallas_src>

<mosaic_0001>
module attributes {stable_mosaic.version = 11 : i64} {
  func.func @encoder_kernel(%arg0: i32, %arg1: memref<1x8x8xf32, #tpu.memory_space<vmem>>, %arg2: memref<8x32xf32, #tpu.memory_space<vmem>>, %arg3: memref<32x256xf32, #tpu.memory_space<vmem>>, %arg4: memref<1x256xf32, #tpu.memory_space<vmem>>, %arg5: memref<1x1x128xf32, #tpu.memory_space<vmem>>) attributes {dimension_semantics = [#tpu.dimension_semantics<parallel>], iteration_bounds = array<i64: 2>, scalar_prefetch = 0 : i64, scratch_operands = 0 : i64, tpu.core_type = #tpu.core_type<tc>, window_params = [{transform_indices = @transform_0, window_bounds = array<i64: 1, 8, 8>}, {pipeline_mode = #tpu.pipeline_mode<synchronous>, transform_indices = @transform_1, window_bounds = array<i64: 8, 32>}, {pipeline_mode = #tpu.pipeline_mode<synchronous>, transform_indices = @transform_2, window_bounds = array<i64: 32, 256>}, {pipeline_mode = #tpu.pipeline_mode<synchronous>, transform_indices = @transform_3, window_bounds = array<i64: 1, 256>}, {transform_indices = @transform_4, window_bounds = array<i64: 1, 1, 128>}]} {
    %c0 = arith.constant 0 : index
    %c0_0 = arith.constant 0 : index
    %c0_1 = arith.constant 0 : index
    %0 = vector.load %arg1[%c0, %c0_0, %c0_1] : memref<1x8x8xf32, #tpu.memory_space<vmem>>, vector<1x8x8xf32>
    %1 = vector.shape_cast %0 : vector<1x8x8xf32> to vector<8x8xf32>
    %c0_2 = arith.constant 0 : index
    %c0_3 = arith.constant 0 : index
    %2 = vector.load %arg2[%c0_2, %c0_3] : memref<8x32xf32, #tpu.memory_space<vmem>>, vector<8x32xf32>
    %c0_4 = arith.constant 0 : index
    %c0_5 = arith.constant 0 : index
    %3 = vector.load %arg3[%c0_4, %c0_5] : memref<32x256xf32, #tpu.memory_space<vmem>>, vector<32x256xf32>
    %c0_6 = arith.constant 0 : index
    %c0_7 = arith.constant 0 : index
    %4 = vector.load %arg4[%c0_6, %c0_7] : memref<1x256xf32, #tpu.memory_space<vmem>>, vector<1x256xf32>
    %5 = vector.extract_strided_slice %3 {offsets = [0, 0], sizes = [32, 32], strides = [1, 1]} : vector<32x256xf32> to vector<32x32xf32>
    %6 = vector.extract_strided_slice %3 {offsets = [0, 64], sizes = [32, 1], strides = [1, 1]} : vector<32x256xf32> to vector<32x1xf32>
    %7 = vector.extract_strided_slice %3 {offsets = [0, 128], sizes = [32, 128], strides = [1, 1]} : vector<32x256xf32> to vector<32x128xf32>
    %8 = vector.extract_strided_slice %4 {offsets = [0, 0], sizes = [1, 32], strides = [1, 1]} : vector<1x256xf32> to vector<1x32xf32>
    %9 = vector.extract_strided_slice %4 {offsets = [0, 32], sizes = [1, 32], strides = [1, 1]} : vector<1x256xf32> to vector<1x32xf32>
    %10 = vector.extract_strided_slice %4 {offsets = [0, 128], sizes = [1, 128], strides = [1, 1]} : vector<1x256xf32> to vector<1x128xf32>
    %cst = arith.constant dense<0.000000e+00> : vector<8x32xf32>
    %11 = tpu.matmul %1, %2, %cst {dimension_numbers = #tpu.dot_dimension_numbers<[1], [0], [0], [1], [0, 0, 1, 1], [], []>} : vector<8x8xf32>, vector<8x32xf32>, vector<8x32xf32> -> vector<8x32xf32>
    %12 = vector.broadcast %8 : vector<1x32xf32> to vector<8x32xf32>
    %13 = arith.addf %11, %12 : vector<8x32xf32>
    %cst_8 = arith.constant 0.000000e+00 : f32
    %14 = vector.broadcast %cst_8 : f32 to vector<8x32xf32>
    %15 = arith.maximumf %13, %14 : vector<8x32xf32>
    %cst_9 = arith.constant dense<0.000000e+00> : vector<8x32xf32>
    %16 = tpu.matmul %15, %5, %cst_9 {dimension_numbers = #tpu.dot_dimension_numbers<[1], [0], [0], [1], [0, 0, 1, 1], [], []>} : vector<8x32xf32>, vector<32x32xf32>, vector<8x32xf32> -> vector<8x32xf32>
    %17 = vector.broadcast %9 : vector<1x32xf32> to vector<8x32xf32>
    %18 = arith.addf %16, %17 : vector<8x32xf32>
    %19 = math.tanh %18 : vector<8x32xf32>
    %cst_10 = arith.constant dense<0.000000e+00> : vector<8x1xf32>
    %20 = tpu.matmul %19, %6, %cst_10 {dimension_numbers = #tpu.dot_dimension_numbers<[1], [0], [0], [1], [0, 0, 1, 1], [], []>} : vector<8x32xf32>, vector<32x1xf32>, vector<8x1xf32> -> vector<8x1xf32>
    %cst_11 = arith.constant dense<0xFF800000> : vector<1xf32>
    %21 = vector.multi_reduction <maximumf>, %20, %cst_11 [0] : vector<8x1xf32> to vector<1xf32>
    %22 = vector.shape_cast %21 : vector<1xf32> to vector<1x1xf32>
    %23 = vector.broadcast %22 : vector<1x1xf32> to vector<8x1xf32>
    %24 = arith.subf %20, %23 : vector<8x1xf32>
    %25 = math.exp %24 : vector<8x1xf32>
    %26 = vector.broadcast %25 : vector<8x1xf32> to vector<8x32xf32>
    %27 = arith.mulf %26, %19 : vector<8x32xf32>
    %cst_12 = arith.constant dense<0.000000e+00> : vector<32xf32>
    %28 = vector.multi_reduction <add>, %27, %cst_12 [0] : vector<8x32xf32> to vector<32xf32>
    %29 = vector.shape_cast %28 : vector<32xf32> to vector<1x32xf32>
    %cst_13 = arith.constant dense<0.000000e+00> : vector<1xf32>
    %30 = vector.multi_reduction <add>, %25, %cst_13 [0] : vector<8x1xf32> to vector<1xf32>
    %31 = vector.shape_cast %30 : vector<1xf32> to vector<1x1xf32>
    %32 = tpu.reciprocal %31 {approx = true} : vector<1x1xf32> -> vector<1x1xf32>
    %33 = vector.broadcast %32 : vector<1x1xf32> to vector<1x32xf32>
    %34 = arith.mulf %29, %33 : vector<1x32xf32>
    %cst_14 = arith.constant dense<0.000000e+00> : vector<1x128xf32>
    %35 = tpu.matmul %34, %7, %cst_14 {dimension_numbers = #tpu.dot_dimension_numbers<[1], [0], [0], [1], [0, 0, 1, 1], [], []>} : vector<1x32xf32>, vector<32x128xf32>, vector<1x128xf32> -> vector<1x128xf32>
    %36 = arith.addf %35, %10 : vector<1x128xf32>
    %c0_15 = arith.constant 0 : index
    %c0_16 = arith.constant 0 : index
    %c0_17 = arith.constant 0 : index
    %37 = vector.load %arg5[%c0_15, %c0_16, %c0_17] : memref<1x1x128xf32, #tpu.memory_space<vmem>>, vector<1x1x128xf32>
    %38 = vector.shape_cast %37 : vector<1x1x128xf32> to vector<1x128xf32>
    %39 = vector.shape_cast %36 : vector<1x128xf32> to vector<1x1x128xf32>
    tpu.vector_store %arg5[%c0_15, %c0_16, %c0_17], %39 {strides = array<i32>} : memref<1x1x128xf32, #tpu.memory_space<vmem>>, vector<1x1x128xf32>,
    return
  }
  func.func @transform_0(%arg0: i32) -> (i32, i32, i32) {
    %c0_i32 = arith.constant 0 : i32
    %c0_i32_0 = arith.constant 0 : i32
    %c0_i32_1 = arith.constant 0 : i32
    return %arg0, %c0_i32, %c0_i32_0 : i32, i32, i32
  }
  func.func @transform_1(%arg0: i32) -> (i32, i32) {
    %c0_i32 = arith.constant 0 : i32
    %c0_i32_0 = arith.constant 0 : i32
    %c0_i32_1 = arith.constant 0 : i32
    return %c0_i32, %c0_i32_0 : i32, i32
  }
  func.func @transform_2(%arg0: i32) -> (i32, i32) {
    %c0_i32 = arith.constant 0 : i32
    %c0_i32_0 = arith.constant 0 : i32
    %c0_i32_1 = arith.constant 0 : i32
    return %c0_i32, %c0_i32_0 : i32, i32
  }
  func.func @transform_3(%arg0: i32) -> (i32, i32) {
    %c0_i32 = arith.constant 0 : i32
    %c0_i32_0 = arith.constant 0 : i32
    %c0_i32_1 = arith.constant 0 : i32
    return %c0_i32, %c0_i32_0 : i32, i32
  }
  func.func @transform_4(%arg0: i32) -> (i32, i32, i32) {
    %c0_i32 = arith.constant 0 : i32
    %c0_i32_0 = arith.constant 0 : i32
    %c0_i32_1 = arith.constant 0 : i32
    return %arg0, %c0_i32, %c0_i32_0 : i32, i32, i32
  }
}

</mosaic_0001>

<llo_original>
// kernel: tpu_custom_call.1
$region0: #{tpu_custom_call.1}
  #allocation0 [shape = 'u32[]', space=smem, size = 0x4, offset = 0x4, fixed_abs, tag = 'smem constant byte address 0x4 - core index']
  #allocation1 [shape = 'u32[144,128]{1,0:T(1,128)}', space=vmem, size = 0x12000, scoped, tag = 'internal scratch']
  %s0 = inlined_call_operand.hbm [shape: f32[2,8,8], index: 0, kind: input, shape index: {}]
  %s1 = inlined_call_operand.hbm [shape: f32[8,32], index: 1, kind: input, shape index: {}]
  %s2 = inlined_call_operand.hbm [shape: f32[32,256], index: 2, kind: input, shape index: {}]
  %s3 = inlined_call_operand.vmem [shape: f32[1,256], index: 3, kind: input, shape index: {}]
  %s4 = inlined_call_operand.hbm [shape: f32[2,1,128], index: 4, kind: output, shape index: {}]
  %s5 = sld [smem:[#allocation0]]
  $region61: #{tpu_custom_call.1} parent=0
    _
  %s7 = ssub.s32 1, %s5
  %s8 = scalar_select 0, %s7, %s5
  $region1: #{tpu_custom_call.1} parent=0
    #allocation2 [shape = 'u8[8192]{0}', space=vmem, size = 0x2000, scoped, tag = 'input window, operand 0']
    #allocation3 [shape = 's32[2]{0}', space=sflag, size = 0x8, scoped, tag = 'scoped memory for tpu_custom_call.1']
    #allocation4 [shape = 's32[2]{0}', space=sflag, size = 0x8, scoped, tag = 'scoped memory for tpu_custom_call.1']
    #allocation5 [shape = 'u8[4096]{0}', space=vmem, size = 0x1000, scoped, tag = 'input window, operand 1, single buffered']
    #allocation6 [shape = 's32[1]{0}', space=sflag, size = 0x4, scoped, tag = 'scoped memory for tpu_custom_call.1']
    #allocation7 [shape = 'u8[32768]{0}', space=vmem, size = 0x8000, scoped, tag = 'input window, operand 2, single buffered']
    #allocation8 [shape = 'u8[1024]{0}', space=vmem, size = 0x400, scoped, tag = 'output window, operand 0']
    %9 = vsyncpa [#allocation3], 0
    %s10 = scalar_lea.sflag [#allocation3], 1
    %11 = vsyncpa %s10, 0
    %12 = vsyncpa [#allocation6], 0
    %13 = vsyncpa [#allocation4], 0
    %s14 = scalar_lea.sflag [#allocation4], 1
    %15 = vsyncpa %s14, 0
    loop: start=0, step=1, limit=4
    $region2: #{tpu_custom_call.1} parent=1 // loop_pre_header
      _
    $region3: #{tpu_custom_call.1} parent=1 // loop_header
      %s17 = sphi 0, %s21
      %p18 = scmp.ge.s32.totalorder %s17, 4
      %s27 = sphi 0, %s29
      %s30 = sphi 0, %s27
      %s31 = sphi 0, %s30
      %s47 = sphi 0, %s31
      %s51 = sphi 0, %s51
      %s53 = sphi 0, %s51
      %s54 = sphi 0, %s53
      %s68 = sphi 0, %s54
      %s72 = sphi 0, %s72
      %s74 = sphi 0, %s72
      %s75 = sphi 0, %s74
      %s89 = sphi 0, %s75
      %s93 = sphi 0, %s93
      %s95 = sphi 0, %s93
      %s96 = sphi 0, %s95
      %s110 = sphi 0, %s96
      %s116 = sphi 0, %s118
      %s119 = sphi 0, %s116
      %s120 = sphi 0, %s119
      %s136 = sphi 0, %s120
    $region4: #{tpu_custom_call.1} parent=1 // loop_header_branch
      %20 = sbr.rel (%p18) target = $region8
    $region5: #{tpu_custom_call.1} parent=1 // loop_body
      %s22 = ssub.s32 %s17, 1
      %s23 = ssub.s32 %s17, 2
      %s24 = sadd.s32 %s17, 1
      %s25 = ssub.s32 %s17, %s24
      %p26 = scmp.eq.s32.totalorder %s25, 0
      %s28 = sadd.s32 %s27, 1
      %s29 = scalar_select %p26, %s27, %s28
      %p32 = pneg %p26
      %p33 = scmp.eq.s32.totalorder %s17, 1
      %p34 = por %p32, %p33
      %p35 = scmp.ne.s32.totalorder %s27, %s30
      %p36 = scmp.eq.s32.totalorder %s17, 0
      %p37 = por %p35, %p36
      %p38 = scmp.ne.s32.totalorder %s27, %s30
      %p39 = scmp.eq.s32.totalorder %s22, 1
      %p40 = por %p38, %p39
      %p41 = scmp.ne.s32.totalorder %s30, %s31
      %p42 = scmp.eq.s32.totalorder %s22, 0
      %p43 = por %p41, %p42
      %p44 = scmp.ne.s32.totalorder %s30, %s31
      %p45 = scmp.eq.s32.totalorder %s23, 1
      %p46 = por %p44, %p45
      %p48 = scmp.ne.s32.totalorder %s31, %s47
      %p49 = scmp.eq.s32.totalorder %s23, 0
      %p50 = por %p48, %p49
      %s52 = sadd.s32 %s51, 1
      %p55 = scmp.eq.s32.totalorder %s17, 1
      %p56 = scmp.ne.s32.totalorder %s51, %s53
      %p57 = scmp.eq.s32.totalorder %s17, 0
      %p58 = por %p56, %p57
      %p59 = scmp.ne.s32.totalorder %s51, %s53
      %p60 = scmp.eq.s32.totalorder %s22, 1
      %p61 = por %p59, %p60
      %p62 = scmp.ne.s32.totalorder %s53, %s54
      %p63 = scmp.eq.s32.totalorder %s22, 0
      %p64 = por %p62, %p63
      %p65 = scmp.ne.s32.totalorder %s53, %s54
      %p66 = scmp.eq.s32.totalorder %s23, 1
      %p67 = por %p65, %p66
      %p69 = scmp.ne.s32.totalorder %s54, %s68
      %p70 = scmp.eq.s32.totalorder %s23, 0
      %p71 = por %p69, %p70
      %s73 = sadd.s32 %s72, 1
      %p76 = scmp.eq.s32.totalorder %s17, 1
      %p77 = scmp.ne.s32.totalorder %s72, %s74
      %p78 = scmp.eq.s32.totalorder %s17, 0
      %p79 = por %p77, %p78
      %p80 = scmp.ne.s32.totalorder %s72, %s74
      %p81 = scmp.eq.s32.totalorder %s22, 1
      %p82 = por %p80, %p81
      %p83 = scmp.ne.s32.totalorder %s74, %s75
      %p84 = scmp.eq.s32.totalorder %s22, 0
      %p85 = por %p83, %p84
      %p86 = scmp.ne.s32.totalorder %s74, %s75
      %p87 = scmp.eq.s32.totalorder %s23, 1
      %p88 = por %p86, %p87
      %p90 = scmp.ne.s32.totalorder %s75, %s89
      %p91 = scmp.eq.s32.totalorder %s23, 0
      %p92 = por %p90, %p91
      %s94 = sadd.s32 %s93, 1
      %p97 = scmp.eq.s32.totalorder %s17, 1
      %p98 = scmp.ne.s32.totalorder %s93, %s95
      %p99 = scmp.eq.s32.totalorder %s17, 0
      %p100 = por %p98, %p99
      %p101 = scmp.ne.s32.totalorder %s93, %s95
      %p102 = scmp.eq.s32.totalorder %s22, 1
      %p103 = por %p101, %p102
      %p104 = scmp.ne.s32.totalorder %s95, %s96
      %p105 = scmp.eq.s32.totalorder %s22, 0
      %p106 = por %p104, %p105
      %p107 = scmp.ne.s32.totalorder %s95, %s96
      %p108 = scmp.eq.s32.totalorder %s23, 1
      %p109 = por %p107, %p108
      %p111 = scmp.ne.s32.totalorder %s96, %s110
      %p112 = scmp.eq.s32.totalorder %s23, 0
      %p113 = por %p111, %p112
      %s114 = ssub.s32 %s17, %s24
      %p115 = scmp.eq.s32.totalorder %s114, 0
      %s117 = sadd.s32 %s116, 1
      %s118 = scalar_select %p115, %s116, %s117
      %p121 = pneg %p115
      %p122 = scmp.eq.s32.totalorder %s17, 1
      %p123 = por %p121, %p122
      %p124 = scmp.ne.s32.totalorder %s116, %s119
      %p125 = scmp.eq.s32.totalorder %s17, 0
      %p126 = por %p124, %p125
      %p127 = scmp.ne.s32.totalorder %s116, %s119
      %p128 = scmp.eq.s32.totalorder %s22, 1
      %p129 = por %p127, %p128
      %p130 = scmp.ne.s32.totalorder %s119, %s120
      %p131 = scmp.eq.s32.totalorder %s22, 0
      %p132 = por %p130, %p131
      %p133 = scmp.ne.s32.totalorder %s119, %s120
      %p134 = scmp.eq.s32.totalorder %s23, 1
      %p135 = por %p133, %p134
      %p137 = scmp.ne.s32.totalorder %s120, %s136
      %p138 = scmp.eq.s32.totalorder %s23, 0
      %p139 = por %p137, %p138
      %p140 = scmp.le.s32.totalorder 1, %s17
      %p141 = scmp.lt.s32.totalorder %s17, 3
      %p142 = pnand %p140, %p141
      %p143 = pneg %p142
      // Predicated region
      $region9: #{tpu_custom_call.1} parent=5 // pred_check
        _
      $region10: #{tpu_custom_call.1} parent=5 // pred_check_branch
        %145 = sbr.rel (%p142) target = $region12
      $region11: #{tpu_custom_call.1} parent=5 // pred_region
        %s146 = ssub.s32 %s17, 1
        // Predicated region
        $region13: #{tpu_custom_call.1} parent=11 // pred_check
          %p147 = pneg %p64
        $region14: #{tpu_custom_call.1} parent=11 // pred_check_branch
          %149 = sbr.rel (%p147) target = $region16
        $region15: #{tpu_custom_call.1} parent=11 // pred_region
          %s151 = ssub.s32 128, 128
          %152 = vsyncadd [#allocation6], %s151
          %s154 = sshll.u32 [#allocation5], 4
          %s155 = int_to_ptr.vmem [resolvable:$true] %s154
          %157 = dma.hbm_to_vmem [thread:$0]  %s1, 128, %s155, [#allocation6]
        $region16: #{tpu_custom_call.1} parent=11 // pred_fallthru
          _
        // Predicated region
        $region17: #{tpu_custom_call.1} parent=11 // pred_check
          %p158 = pneg %p85
        $region18: #{tpu_custom_call.1} parent=11 // pred_check_branch
          %160 = sbr.rel (%p158) target = $region20
        $region19: #{tpu_custom_call.1} parent=11 // pred_region
          %s162 = ssub.s32 1024, 1024
          %163 = vsyncadd [#allocation6], %s162
          %s164 = sshll.u32 [#allocation7], 4
          %s165 = int_to_ptr.vmem [resolvable:$true] %s164
          %170 = dma.hbm_to_vmem [thread:$0]  %s2, 1024, %s165, [#allocation6], 256, 256, 16
        $region20: #{tpu_custom_call.1} parent=11 // pred_fallthru
          _
        // Predicated region
        $region21: #{tpu_custom_call.1} parent=11 // pred_check
          %p171 = pneg %p106
        $region22: #{tpu_custom_call.1} parent=11 // pred_check_branch
          %173 = sbr.rel (%p171) target = $region24
        $region23: #{tpu_custom_call.1} parent=11 // pred_region
          _
        $region24: #{tpu_custom_call.1} parent=11 // pred_fallthru
          _
      $region12: #{tpu_custom_call.1} parent=5 // pred_fallthru
        _
      %p174 = scmp.lt.s32.totalorder %s17, 2
      // Predicated region
      $region25: #{tpu_custom_call.1} parent=5 // pred_check
        %p175 = pneg %p174
      $region26: #{tpu_custom_call.1} parent=5 // pred_check_branch
        %177 = sbr.rel (%p175) target = $region28
      $region27: #{tpu_custom_call.1} parent=5 // pred_region
        // Predicated region
        $region29: #{tpu_custom_call.1} parent=27 // pred_check
          %p178 = pneg %p37
        $region30: #{tpu_custom_call.1} parent=27 // pred_check_branch
          %180 = sbr.rel (%p178) target = $region32
        $region31: #{tpu_custom_call.1} parent=27 // pred_region
          %s181 = sand.u32 %s27, 1
          %s182 = scalar_lea.sflag [#allocation3], %s181
          %s183 = sand.u32 %s27, 1
          %s184 = smul.addr %s183, 8
          %s185 = scalar_lea.vmem [#allocation2], %s184
          %s187 = ssub.s32 128, 128
          %188 = vsyncadd %s182, %s187
          %s189 = smul.addr %s17, 128
          %s190 = scalar_lea.hbm %s0, %s189
          %s192 = sshll.u32 %s185, 4
          %s193 = int_to_ptr.vmem [resolvable:$true] %s192
          %195 = dma.hbm_to_vmem [thread:$0]  %s190, 128, %s193, %s182
        $region32: #{tpu_custom_call.1} parent=27 // pred_fallthru
          _
      $region28: #{tpu_custom_call.1} parent=5 // pred_fallthru
        _
      %p196 = scmp.le.s32.totalorder 1, %s17
      %p197 = scmp.lt.s32.totalorder %s17, 3
      %p198 = pnand %p196, %p197
      %p199 = pneg %p198
      // Predicated region
      $region33: #{tpu_custom_call.1} parent=5 // pred_check
        _
      $region34: #{tpu_custom_call.1} parent=5 // pred_check_branch
        %201 = sbr.rel (%p198) target = $region36
      $region35: #{tpu_custom_call.1} parent=5 // pred_region
        %s202 = ssub.s32 %s17, 1
        %s203 = sand.u32 %s30, 1
        %s204 = scalar_lea.sflag [#allocation3], %s203
        %s205 = sand.u32 %s30, 1
        %s206 = smul.addr %s205, 8
        %s207 = scalar_lea.vmem [#allocation2], %s206
        // Predicated region
        $region37: #{tpu_custom_call.1} parent=35 // pred_check
          %p208 = pneg %p43
        $region38: #{tpu_custom_call.1} parent=35 // pred_check_branch
          %210 = sbr.rel (%p208) target = $region40
        $region39: #{tpu_custom_call.1} parent=35 // pred_region
          %211 = dma.done %s204, 128
        $region40: #{tpu_custom_call.1} parent=35 // pred_fallthru
          _
        // Predicated region
        $region41: #{tpu_custom_call.1} parent=35 // pred_check
          %p212 = pneg %p64
        $region42: #{tpu_custom_call.1} parent=35 // pred_check_branch
          %214 = sbr.rel (%p212) target = $region44
        $region43: #{tpu_custom_call.1} parent=35 // pred_region
          %215 = dma.done [#allocation6], 128
        $region44: #{tpu_custom_call.1} parent=35 // pred_fallthru
          _
        // Predicated region
        $region45: #{tpu_custom_call.1} parent=35 // pred_check
          %p216 = pneg %p85
        $region46: #{tpu_custom_call.1} parent=35 // pred_check_branch
          %218 = sbr.rel (%p216) target = $region48
        $region47: #{tpu_custom_call.1} parent=35 // pred_region
          %219 = dma.done [#allocation6], 1024
        $region48: #{tpu_custom_call.1} parent=35 // pred_fallthru
          _
        %s220 = sand.u32 %s30, 1
        %s221 = scalar_lea.sflag [#allocation3], %s220
        %s222 = sand.u32 %s30, 1
        %s223 = smul.addr %s222, 8
        %s224 = scalar_lea.vmem [#allocation2], %s223
        %p225 = pneg %p43
        %p226 = pneg %p40
        %p227 = pneg %p64
        %p228 = pneg %p61
        %p229 = pneg %p85
        %p230 = pneg %p82
        %p231 = pneg %p106
        %p232 = pneg %p103
        %p233 = pneg %p132
        %p234 = pneg %p129
        %s235 = sand.u32 %s119, 1
        %s236 = scalar_lea.sflag [#allocation4], %s235
        %s237 = sand.u32 %s119, 1
        %s238 = scalar_lea.vmem [#allocation8], %s237
        %v239 = vld [vmem:[%s207] sm:$0xff]
        %v240 = vld [vmem:[#allocation5] sm:$0xff]
        %v241 = vld [vmem:[#allocation7] sm:$0xff]
        %v242 = vld [vmem:[#allocation7 + $0x8] sm:$0xff]
        %v243 = vld [vmem:[#allocation7 + $0x10] sm:$0xff]
        %v244 = vld [vmem:[#allocation7 + $0x18] sm:$0xff]
        %v245 = vld [vmem:[#allocation7 + $0x20] sm:$0xff]
        %v246 = vld [vmem:[#allocation7 + $0x28] sm:$0xff]
        %v247 = vld [vmem:[#allocation7 + $0x30] sm:$0xff]
        %v248 = vld [vmem:[#allocation7 + $0x38] sm:$0xff]
        %v249 = vld [vmem:[%s3] sm:$0x3]
        %v251 = vlaneseq
        %v252 = vshrl.u32 %v251, 7
        %v253 = vsub.s32 0, %v252
        %v254 = vrot.slane %v249, %v253
        %vm256 = vcmask 64512
        %v258 = vsel %vm256, %v239, 0
        %260 = vmatprep.subr.mxu0 0.0
        %261 = vmatpush1.msra.mxu0 %v240
        %262 = vmatprep.subr.mxu0 0.0
        %263 = vmatpush1.msra.mxu0 0.0
        %264 = vmatprep.subr.mxu0 0.0
        %265 = vmatpush1.msra.mxu0 0.0
        %266 = vmatprep.subr.mxu0 0.0
        %267 = vmatpush1.msra.mxu0 0.0
        %268 = vmatprep.subr.mxu0 0.0
        %269 = vmatpush1.msra.mxu0 0.0
        %270 = vmatprep.subr.mxu0 0.0
        %271 = vmatpush1.msra.mxu0 0.0
        %272 = vmatprep.subr.mxu0 0.0
        %273 = vmatpush1.msra.mxu0 0.0
        %274 = vmatprep.subr.mxu0 0.0
        %275 = vmatpush1.msra.mxu0 0.0
        %276 = vmatprep.subr.mxu0 0.0
        %277 = vmatpush1.msra.mxu0 0.0
        %278 = vmatprep.subr.mxu0 0.0
        %279 = vmatpush1.msra.mxu0 0.0
        %280 = vmatprep.subr.mxu0 0.0
        %281 = vmatpush1.msra.mxu0 0.0
        %282 = vmatprep.subr.mxu0 0.0
        %283 = vmatpush1.msra.mxu0 0.0
        %284 = vmatprep.subr.mxu0 0.0
        %285 = vmatpush1.msra.mxu0 0.0
        %286 = vmatprep.subr.mxu0 0.0
        %287 = vmatpush1.msra.mxu0 0.0
        %288 = vmatprep.subr.mxu0 0.0
        %289 = vmatpush1.msra.mxu0 0.0
        %290 = vmatprep.subr.mxu0 0.0
        %291 = vmatpush1.msra.mxu0 0.0
        %292 = vmatprep.subr.mxu0 0.0
        %293 = vmatpush1.msra.mxu0 0.0
        %294 = vmatprep.subr.mxu0 0.0
        %295 = vmatpush1.msra.mxu0 0.0
        %296 = vmatprep.subr.mxu0 0.0
        %297 = vmatpush1.msra.mxu0 0.0
        %298 = vmatprep.subr.mxu0 0.0
        %299 = vmatpush1.msra.mxu0 0.0
        %300 = vmatprep.subr.mxu0 0.0
        %301 = vmatpush1.msra.mxu0 0.0
        %302 = vmatprep.subr.mxu0 0.0
        %303 = vmatpush1.msra.mxu0 0.0
        %304 = vmatprep.subr.mxu0 0.0
        %305 = vmatpush1.msra.mxu0 0.0
        %306 = vmatprep.subr.mxu0 0.0
        %307 = vmatpush1.msra.mxu0 0.0
        %308 = vmatprep.subr.mxu0 0.0
        %309 = vmatpush1.msra.mxu0 0.0
        %310 = vmatprep.subr.mxu0 0.0
        %311 = vmatpush1.msra.mxu0 0.0
        %312 = vmatprep.subr.mxu0 0.0
        %313 = vmatpush1.msra.mxu0 0.0
        %314 = vmatprep.subr.mxu0 0.0
        %315 = vmatpush1.msra.mxu0 0.0
        %316 = vmatprep.subr.mxu0 0.0
        %317 = vmatpush1.msra.mxu0 0.0
        %318 = vmatprep.subr.mxu0 0.0
        %319 = vmatpush1.msra.mxu0 0.0
        %320 = vmatprep.subr.mxu0 0.0
        %321 = vmatpush1.msra.mxu0 0.0
        %322 = vmatprep.subr.mxu0 0.0
        %323 = vmatpush1.msra.mxu0 0.0
        %324 = vmatprep.mubr.f32.mxu0 0.0
        %325 = vmatmul.mubr.f32.gmra.mrb[0].mxu0 %v258
        %v326 = vpop.f32.mrb[0].mxu0
        %v327 = vadd.f32 %v254, %v326
        %v328 = vpop.f32.mrb[0].mxu0
        %329 = vdwg.mxu0
        %v330 = vmax.f32 %v327, 0.0
        %331 = vrot.lane.b32.xlu0 %v254, 96
        %v332 = vpop.permute.xlu0 %331
        %vm334 = vcmask 261120
        %v336 = vsel %vm334, %v330, 0
        %338 = vmatprep.subr.mxu0 0.0
        %339 = vmatpush1.msra.mxu0 %v241
        %340 = vmatprep.subr.mxu0 0.0
        %341 = vmatpush1.msra.mxu0 %v243
        %342 = vmatprep.subr.mxu0 0.0
        %343 = vmatpush1.msra.mxu0 %v245
        %344 = vmatprep.subr.mxu0 0.0
        %345 = vmatpush1.msra.mxu0 %v247
        %346 = vmatprep.subr.mxu0 0.0
        %347 = vmatpush1.msra.mxu0 0.0
        %348 = vmatprep.subr.mxu0 0.0
        %349 = vmatpush1.msra.mxu0 0.0
        %350 = vmatprep.subr.mxu0 0.0
        %351 = vmatpush1.msra.mxu0 0.0
        %352 = vmatprep.subr.mxu0 0.0
        %353 = vmatpush1.msra.mxu0 0.0
        %354 = vmatprep.subr.mxu0 0.0
        %355 = vmatpush1.msra.mxu0 0.0
        %356 = vmatprep.subr.mxu0 0.0
        %357 = vmatpush1.msra.mxu0 0.0
        %358 = vmatprep.subr.mxu0 0.0
        %359 = vmatpush1.msra.mxu0 0.0
        %360 = vmatprep.subr.mxu0 0.0
        %361 = vmatpush1.msra.mxu0 0.0
        %362 = vmatprep.subr.mxu0 0.0
        %363 = vmatpush1.msra.mxu0 0.0
        %364 = vmatprep.subr.mxu0 0.0
        %365 = vmatpush1.msra.mxu0 0.0
        %366 = vmatprep.subr.mxu0 0.0
        %367 = vmatpush1.msra.mxu0 0.0
        %368 = vmatprep.subr.mxu0 0.0
        %369 = vmatpush1.msra.mxu0 0.0
        %370 = vmatprep.subr.mxu0 0.0
        %371 = vmatpush1.msra.mxu0 0.0
        %372 = vmatprep.subr.mxu0 0.0
        %373 = vmatpush1.msra.mxu0 0.0
        %374 = vmatprep.subr.mxu0 0.0
        %375 = vmatpush1.msra.mxu0 0.0
        %376 = vmatprep.subr.mxu0 0.0
        %377 = vmatpush1.msra.mxu0 0.0
        %378 = vmatprep.subr.mxu0 0.0
        %379 = vmatpush1.msra.mxu0 0.0
        %380 = vmatprep.subr.mxu0 0.0
        %381 = vmatpush1.msra.mxu0 0.0
        %382 = vmatprep.subr.mxu0 0.0
        %383 = vmatpush1.msra.mxu0 0.0
        %384 = vmatprep.subr.mxu0 0.0
        %385 = vmatpush1.msra.mxu0 0.0
        %386 = vmatprep.subr.mxu0 0.0
        %387 = vmatpush1.msra.mxu0 0.0
        %388 = vmatprep.subr.mxu0 0.0
        %389 = vmatpush1.msra.mxu0 0.0
        %390 = vmatprep.subr.mxu0 0.0
        %391 = vmatpush1.msra.mxu0 0.0
        %392 = vmatprep.subr.mxu0 0.0
        %393 = vmatpush1.msra.mxu0 0.0
        %394 = vmatprep.subr.mxu0 0.0
        %395 = vmatpush1.msra.mxu0 0.0
        %396 = vmatprep.subr.mxu0 0.0
        %397 = vmatpush1.msra.mxu0 0.0
        %398 = vmatprep.subr.mxu0 0.0
        %399 = vmatpush1.msra.mxu0 0.0
        %400 = vmatprep.subr.mxu0 0.0
        %401 = vmatpush1.msra.mxu0 0.0
        %402 = vmatprep.mubr.f32.mxu0 0.0
        %403 = vmatmul.mubr.f32.gmra.mrb[0].mxu0 %v336
        %v404 = vpop.f32.mrb[0].mxu0
        %v405 = vadd.f32 %v332, %v404
        %v406 = vpop.f32.mrb[0].mxu0
        %407 = vdwg.mxu0
        %v408 = vtanh.pop %v405
        %413 = vrot.lane.b32.xlu0 %v241, 64
        %v414 = vpop.permute.xlu0 %413
        %415 = vrot.lane.b32.xlu0 %v243, 64
        %v416 = vpop.permute.xlu0 %415
        %417 = vrot.lane.b32.xlu0 %v245, 64
        %v418 = vpop.permute.xlu0 %417
        %419 = vrot.lane.b32.xlu0 %v247, 64
        %v420 = vpop.permute.xlu0 %419
        %v426 = vsel %vm334, %v408, 0
        %428 = vmatprep.subr.mxu0 0.0
        %429 = vmatpush1.msra.mxu0 %v414
        %430 = vmatprep.subr.mxu0 0.0
        %431 = vmatpush1.msra.mxu0 %v416
        %432 = vmatprep.subr.mxu0 0.0
        %433 = vmatpush1.msra.mxu0 %v418
        %434 = vmatprep.subr.mxu0 0.0
        %435 = vmatpush1.msra.mxu0 %v420
        %436 = vmatprep.subr.mxu0 0.0
        %437 = vmatpush1.msra.mxu0 0.0
        %438 = vmatprep.subr.mxu0 0.0
        %439 = vmatpush1.msra.mxu0 0.0
        %440 = vmatprep.subr.mxu0 0.0
        %441 = vmatpush1.msra.mxu0 0.0
        %442 = vmatprep.subr.mxu0 0.0
        %443 = vmatpush1.msra.mxu0 0.0
        %444 = vmatprep.subr.mxu0 0.0
        %445 = vmatpush1.msra.mxu0 0.0
        %446 = vmatprep.subr.mxu0 0.0
        %447 = vmatpush1.msra.mxu0 0.0
        %448 = vmatprep.subr.mxu0 0.0
        %449 = vmatpush1.msra.mxu0 0.0
        %450 = vmatprep.subr.mxu0 0.0
        %451 = vmatpush1.msra.mxu0 0.0
        %452 = vmatprep.subr.mxu0 0.0
        %453 = vmatpush1.msra.mxu0 0.0
        %454 = vmatprep.subr.mxu0 0.0
        %455 = vmatpush1.msra.mxu0 0.0
        %456 = vmatprep.subr.mxu0 0.0
        %457 = vmatpush1.msra.mxu0 0.0
        %458 = vmatprep.subr.mxu0 0.0
        %459 = vmatpush1.msra.mxu0 0.0
        %460 = vmatprep.subr.mxu0 0.0
        %461 = vmatpush1.msra.mxu0 0.0
        %462 = vmatprep.subr.mxu0 0.0
        %463 = vmatpush1.msra.mxu0 0.0
        %464 = vmatprep.subr.mxu0 0.0
        %465 = vmatpush1.msra.mxu0 0.0
        %466 = vmatprep.subr.mxu0 0.0
        %467 = vmatpush1.msra.mxu0 0.0
        %468 = vmatprep.subr.mxu0 0.0
        %469 = vmatpush1.msra.mxu0 0.0
        %470 = vmatprep.subr.mxu0 0.0
        %471 = vmatpush1.msra.mxu0 0.0
        %472 = vmatprep.subr.mxu0 0.0
        %473 = vmatpush1.msra.mxu0 0.0
        %474 = vmatprep.subr.mxu0 0.0
        %475 = vmatpush1.msra.mxu0 0.0
        %476 = vmatprep.subr.mxu0 0.0
        %477 = vmatpush1.msra.mxu0 0.0
        %478 = vmatprep.subr.mxu0 0.0
        %479 = vmatpush1.msra.mxu0 0.0
        %480 = vmatprep.subr.mxu0 0.0
        %481 = vmatpush1.msra.mxu0 0.0
        %482 = vmatprep.subr.mxu0 0.0
        %483 = vmatpush1.msra.mxu0 0.0
        %484 = vmatprep.subr.mxu0 0.0
        %485 = vmatpush1.msra.mxu0 0.0
        %486 = vmatprep.subr.mxu0 0.0
        %487 = vmatpush1.msra.mxu0 0.0
        %488 = vmatprep.subr.mxu0 0.0
        %489 = vmatpush1.msra.mxu0 0.0
        %490 = vmatprep.subr.mxu0 0.0
        %491 = vmatpush1.msra.mxu0 0.0
        %492 = vmatprep.mubr.f32.mxu0 0.0
        %493 = vmatmul.mubr.f32.gmra.mrb[0].mxu0 %v426
        %v494 = vpop.f32.mrb[0].mxu0
        %v495 = vadd.f32 0.0, %v494
        %v496 = vpop.f32.mrb[0].mxu0
        %497 = vdwg.mxu0
        %vm498 = vcmask 7168
        %v499 = vsel %vm498, %v495, -inf
        %v500 = vrot.slane %v499, 4
        %v501 = vmax.f32 %v499, %v500
        %v502 = vrot.slane %v501, 2
        %v503 = vmax.f32 %v501, %v502
        %v504 = vrot.slane %v503, 1
        %v505 = vmax.f32 %v503, %v504
        %v506 = vsub.f32 %v495, %v505
        %v507 = vmul.f32 %v506, 1.442695
        %v508 = vpow.pop %v507
        %510 = vset.pattern.permute.xlu0 0
        %511 = vperm.xlu0 %510, %v508
        %v512 = vpop.permute.xlu0 %511
        %v514 = vmul.f32 %v512, %v408
        %v515 = vsel %vm334, %v514, 0.0
        %v516 = vrot.slane %v515, 4
        %v517 = vadd.f32 %v515, %v516
        %v518 = vrot.slane %v517, 2
        %v519 = vadd.f32 %v517, %v518
        %v520 = vrot.slane %v519, 1
        %v521 = vadd.f32 %v519, %v520
        %v522 = vsel %vm498, %v508, 0.0
        %v523 = vrot.slane %v522, 4
        %v524 = vadd.f32 %v522, %v523
        %v525 = vrot.slane %v524, 2
        %v526 = vadd.f32 %v524, %v525
        %v527 = vrot.slane %v526, 1
        %v528 = vadd.f32 %v526, %v527
        %v529 = vrcp.pop %v528
        %531 = vset.pattern.permute.xlu0 0
        %532 = vperm.xlu0 %531, %v529
        %v533 = vpop.permute.xlu0 %532
        %v535 = vmul.f32 %v521, %v533
        %v536 = vlaneseq
        %v537 = vshrl.u32 %v536, 7
        %v538 = vsub.s32 1, %v537
        %v539 = vrot.slane %v249, %v538
        %v542 = vsel %vm334, %v535, 0
        %544 = vmatprep.subr.mxu0 0.0
        %545 = vmatpush1.msra.mxu0 %v242
        %546 = vmatprep.subr.mxu0 0.0
        %547 = vmatpush1.msra.mxu0 %v244
        %548 = vmatprep.subr.mxu0 0.0
        %549 = vmatpush1.msra.mxu0 %v246
        %550 = vmatprep.subr.mxu0 0.0
        %551 = vmatpush1.msra.mxu0 %v248
        %552 = vmatprep.subr.mxu0 0.0
        %553 = vmatpush1.msra.mxu0 0.0
        %554 = vmatprep.subr.mxu0 0.0
        %555 = vmatpush1.msra.mxu0 0.0
        %556 = vmatprep.subr.mxu0 0.0
        %557 = vmatpush1.msra.mxu0 0.0
        %558 = vmatprep.subr.mxu0 0.0
        %559 = vmatpush1.msra.mxu0 0.0
        %560 = vmatprep.subr.mxu0 0.0
        %561 = vmatpush1.msra.mxu0 0.0
        %562 = vmatprep.subr.mxu0 0.0
        %563 = vmatpush1.msra.mxu0 0.0
        %564 = vmatprep.subr.mxu0 0.0
        %565 = vmatpush1.msra.mxu0 0.0
        %566 = vmatprep.subr.mxu0 0.0
        %567 = vmatpush1.msra.mxu0 0.0
        %568 = vmatprep.subr.mxu0 0.0
        %569 = vmatpush1.msra.mxu0 0.0
        %570 = vmatprep.subr.mxu0 0.0
        %571 = vmatpush1.msra.mxu0 0.0
        %572 = vmatprep.subr.mxu0 0.0
        %573 = vmatpush1.msra.mxu0 0.0
        %574 = vmatprep.subr.mxu0 0.0
        %575 = vmatpush1.msra.mxu0 0.0
        %576 = vmatprep.subr.mxu0 0.0
        %577 = vmatpush1.msra.mxu0 0.0
        %578 = vmatprep.subr.mxu0 0.0
        %579 = vmatpush1.msra.mxu0 0.0
        %580 = vmatprep.subr.mxu0 0.0
        %581 = vmatpush1.msra.mxu0 0.0
        %582 = vmatprep.subr.mxu0 0.0
        %583 = vmatpush1.msra.mxu0 0.0
        %584 = vmatprep.subr.mxu0 0.0
        %585 = vmatpush1.msra.mxu0 0.0
        %586 = vmatprep.subr.mxu0 0.0
        %587 = vmatpush1.msra.mxu0 0.0
        %588 = vmatprep.subr.mxu0 0.0
        %589 = vmatpush1.msra.mxu0 0.0
        %590 = vmatprep.subr.mxu0 0.0
        %591 = vmatpush1.msra.mxu0 0.0
        %592 = vmatprep.subr.mxu0 0.0
        %593 = vmatpush1.msra.mxu0 0.0
        %594 = vmatprep.subr.mxu0 0.0
        %595 = vmatpush1.msra.mxu0 0.0
        %596 = vmatprep.subr.mxu0 0.0
        %597 = vmatpush1.msra.mxu0 0.0
        %598 = vmatprep.subr.mxu0 0.0
        %599 = vmatpush1.msra.mxu0 0.0
        %600 = vmatprep.subr.mxu0 0.0
        %601 = vmatpush1.msra.mxu0 0.0
        %602 = vmatprep.subr.mxu0 0.0
        %603 = vmatpush1.msra.mxu0 0.0
        %604 = vmatprep.subr.mxu0 0.0
        %605 = vmatpush1.msra.mxu0 0.0
        %606 = vmatprep.subr.mxu0 0.0
        %607 = vmatpush1.msra.mxu0 0.0
        %608 = vmatprep.mubr.f32.mxu0 0.0
        %609 = vmatmul.mubr.f32.gmra.mrb[0].mxu0 %v542
        %v610 = vpop.f32.mrb[0].mxu0
        %v611 = vadd.f32 %v539, %v610
        %v612 = vpop.f32.mrb[0].mxu0
        %613 = vdwg.mxu0
        %614 = vst [vmem:[%s238] sm:$0x1] %v611
        %s615 = sand.u32 %s119, 1
        %s616 = scalar_lea.sflag [#allocation4], %s615
        %s617 = sand.u32 %s119, 1
        %s618 = scalar_lea.vmem [#allocation8], %s617
        // Predicated region
        $region49: #{tpu_custom_call.1} parent=35 // pred_check
          %p619 = pneg %p129
        $region50: #{tpu_custom_call.1} parent=35 // pred_check_branch
          %621 = sbr.rel (%p619) target = $region52
        $region51: #{tpu_custom_call.1} parent=35 // pred_region
          %s623 = ssub.s32 16, 16
          %624 = vsyncadd %s616, %s623
          %s625 = smul.addr %s22, 16
          %s626 = scalar_lea.hbm %s4, %s625
          %s628 = sshll.u32 %s618, 4
          %s629 = int_to_ptr.vmem [resolvable:$true] %s628
          %631 = dma.vmem_to_hbm [thread:$0]  %s629, 16, %s626, %s616
        $region52: #{tpu_custom_call.1} parent=35 // pred_fallthru
          _
      $region36: #{tpu_custom_call.1} parent=5 // pred_fallthru
        _
      %p632 = scmp.le.s32.totalorder 2, %s17
      // Predicated region
      $region53: #{tpu_custom_call.1} parent=5 // pred_check
        %p633 = pneg %p632
      $region54: #{tpu_custom_call.1} parent=5 // pred_check_branch
        %635 = sbr.rel (%p633) target = $region56
      $region55: #{tpu_custom_call.1} parent=5 // pred_region
        %s636 = ssub.s32 %s17, 2
        // Predicated region
        $region57: #{tpu_custom_call.1} parent=55 // pred_check
          %p637 = pneg %p135
        $region58: #{tpu_custom_call.1} parent=55 // pred_check_branch
          %639 = sbr.rel (%p637) target = $region60
        $region59: #{tpu_custom_call.1} parent=55 // pred_region
          %s640 = sand.u32 %s120, 1
          %s641 = scalar_lea.sflag [#allocation4], %s640
          %s642 = sand.u32 %s120, 1
          %s643 = scalar_lea.vmem [#allocation8], %s642
          %644 = dma.done %s641, 16
        $region60: #{tpu_custom_call.1} parent=55 // pred_fallthru
          _
      $region56: #{tpu_custom_call.1} parent=5 // pred_fallthru
        _
    $region6: #{tpu_custom_call.1} parent=1 // loop_footer
      %s21 = sadd.s32 1, %s17
    $region7: #{tpu_custom_call.1} parent=1 // loop_footer_branch
      %16 = sbr.rel target = $region3
    $region8: #{tpu_custom_call.1} parent=1 // loop_exit
      _
    %645 = vsyncpa [#allocation3], 1
    %s646 = scalar_lea.sflag [#allocation3], 1
    %647 = vsyncpa %s646, 1
    %648 = vsyncpa [#allocation6], 1
    %649 = vsyncpa [#allocation4], 1
    %s650 = scalar_lea.sflag [#allocation4], 1
    %651 = vsyncpa %s650, 1

</llo_original>
